<compile_context>
chip_gen: v5e
topology: v5e:2x2
jax: 0.10.0
libtpu: 0.0.40
codegen_flags: <defaults>
</compile_context>

<pallas_src>
import jax
import jax.numpy as jnp
from jax.experimental import pallas as pl
from jax.experimental.pallas import tpu as pltpu


# ----------------------------------------------------------------------------- kernel


def _actor_critic_kernel(x_ref, w1_ref, b1_ref, w2_ref, b2_ref, w3_ref, b3_ref,
                         out_ref):
    x = x_ref[...]

    # layer 1 (fused critic+actor): [TB, F] @ [F, 2H]
    z1 = jnp.dot(x, w1_ref[...], preferred_element_type=jnp.float32) + b1_ref[...]
    z1 = jnp.maximum(z1, 0.0)

    # layer 2 (block-diagonal fused): [TB, 2H] @ [2H, 2H]
    z2 = jnp.dot(z1, w2_ref[...], preferred_element_type=jnp.float32) + b2_ref[...]
    z2 = jnp.maximum(z2, 0.0)

    # layer 3 (block-diagonal fused, narrow lane-padded output): [TB, 2H] @ [2H, OUT_PAD]
    # column 0 = value, columns [1, 1+num_outputs) = pre-tanh mu, rest = 0.
    # tanh is applied in the wrapper on the sliced mu columns only.
    z3 = jnp.dot(z2, w3_ref[...], preferred_element_type=jnp.float32) + b3_ref[...]
    out_ref[...] = z3.astype(out_ref.dtype)


# ----------------------------------------------------------------------------- wrapper


def _round_up(a, b):
    return ((a + b - 1) // b) * b


def _pick_batch_tile(b8):
    """Big tiles to amortize per-step overhead, but >=4 steps for large batches
    (v7x two-core sharding + pipelining), >=2 steps for moderate batches."""
    if b8 >= 4096:
        return 1024
    if b8 >= 2048:
        return 512
    if b8 >= 512:
        return 256
    return b8


@jax.jit
def actor_critic_forward(x, packed):
    """Fused ActorCritic forward.  Returns (mu, std, value).

    The PyTorch module returns (Normal(mu, std), value); the distribution object
    has no Pallas equivalent, so we return its parameters.
    """
    B, F = x.shape
    num_outputs = packed["log_std"].shape[1]
    out_pad = packed["w3"].shape[1]          # round_up(1 + num_outputs, 8)
    two_h = packed["w1"].shape[1]            # 2 * hidden

    # Pad batch only to a sublane multiple (8); the grid handles ragged tiles.
    b8 = _round_up(B, 8)
    x_pad = x if b8 == B else jnp.pad(x, ((0, b8 - B), (0, 0)))
    tb = _pick_batch_tile(b8)
    grid = (pl.cdiv(b8, tb),)

    slab = pl.pallas_call(
        _actor_critic_kernel,
        out_shape=jax.ShapeDtypeStruct((b8, out_pad), jnp.float32),
        grid=grid,
        in_specs=[
            pl.BlockSpec((tb, F), lambda i: (i, 0)),          # x: tiled over batch
            pl.BlockSpec((F, two_h), lambda i: (0, 0)),       # w1 (resident)
            pl.BlockSpec((1, two_h), lambda i: (0, 0)),       # b1
            pl.BlockSpec((two_h, two_h), lambda i: (0, 0)),   # w2
            pl.BlockSpec((1, two_h), lambda i: (0, 0)),       # b2
            pl.BlockSpec((two_h, out_pad), lambda i: (0, 0)), # w3
            pl.BlockSpec((1, out_pad), lambda i: (0, 0)),     # b3
        ],
        out_specs=pl.BlockSpec((tb, out_pad), lambda i: (i, 0)),
        compiler_params=pltpu.CompilerParams(
            dimension_semantics=("parallel",),
            vmem_limit_bytes=32 * 1024 * 1024,
        ),
    )(x_pad, packed["w1"], packed["b1"], packed["w2"], packed["b2"],
      packed["w3"], packed["b3"])

    value = slab[:B, 0:1]
    mu = jnp.tanh(slab[:B, 1:1 + num_outputs])   # tanh fuses into the slice read
    # std does not depend on x -> computed outside the kernel.
    std = jnp.broadcast_to(jnp.exp(packed["log_std"]) * 0.2, mu.shape)
    return mu, std, value


# ----------------------------------------------------------------------------- params


def init_actor_critic_params(key, num_inputs, num_outputs, hidden_size, std=0.0):
    """Matches ActorCritic.init_weights: W ~ N(0, 0.1), b = 0.1, log_std = std.
    Weights stored as [in, out] (PyTorch weight transposed)."""
    keys = jax.random.split(key, 6)

    def w(k, fan_in, fan_out):
        return (0.1 * jax.random.normal(k, (fan_in, fan_out))).astype(jnp.float32)

    def b(fan_out):
        return jnp.full((1, fan_out), 0.1, dtype=jnp.float32)

    return {
        "critic_w1": w(keys[0], num_inputs, hidden_size), "critic_b1": b(hidden_size),
        "critic_w2": w(keys[1], hidden_size, hidden_size), "critic_b2": b(hidden_size),
        "critic_w3": w(keys[2], hidden_size, 1), "critic_b3": b(1),
        "actor_w1": w(keys[3], num_inputs, hidden_size), "actor_b1": b(hidden_size),
        "actor_w2": w(keys[4], hidden_size, hidden_size), "actor_b2": b(hidden_size),
        "actor_w3": w(keys[5], hidden_size, num_outputs), "actor_b3": b(num_outputs),
        "log_std": jnp.full((1, num_outputs), std, dtype=jnp.float32),
    }


def pack_params(p):
    """One-time packing of the two MLPs into fused / block-diagonal weights."""
    num_inputs, hidden = p["critic_w1"].shape
    num_outputs = p["actor_w3"].shape[1]
    two_h = 2 * hidden
    # Narrow output slab: col 0 = value, cols 1..1+O = mu, padded to a sublane
    # multiple only (not 128) to keep output HBM writeback minimal.
    out_pad = _round_up(1 + num_outputs, 8)

    # layer 1: simple concat along output features.
    w1 = jnp.concatenate([p["critic_w1"], p["actor_w1"]], axis=1)          # [F, 2H]
    b1 = jnp.concatenate([p["critic_b1"], p["actor_b1"]], axis=1)          # [1, 2H]

    # layer 2: block-diagonal so the two streams stay independent.
    w2 = jnp.zeros((two_h, two_h), jnp.float32)
    w2 = w2.at[:hidden, :hidden].set(p["critic_w2"])
    w2 = w2.at[hidden:, hidden:].set(p["actor_w2"])
    b2 = jnp.concatenate([p["critic_b2"], p["actor_b2"]], axis=1)          # [1, 2H]

    # layer 3: block-diagonal + narrow lane padding.
    w3 = jnp.zeros((two_h, out_pad), jnp.float32)
    w3 = w3.at[:hidden, 0:1].set(p["critic_w3"])
    w3 = w3.at[hidden:, 1:1 + num_outputs].set(p["actor_w3"])
    b3 = jnp.zeros((1, out_pad), jnp.float32)
    b3 = b3.at[:, 0:1].set(p["critic_b3"])
    b3 = b3.at[:, 1:1 + num_outputs].set(p["actor_b3"])

    return {"w1": w1, "b1": b1, "w2": w2, "b2": b2, "w3": w3, "b3": b3,
            "log_std": p["log_std"]}


def _reference_forward(x, p):
    """Pure-JAX reference on the unfused params."""
    relu = lambda t: jnp.maximum(t, 0.0)
    h = relu(x @ p["critic_w1"] + p["critic_b1"])
    h = relu(h @ p["critic_w2"] + p["critic_b2"])
    value = h @ p["critic_w3"] + p["critic_b3"]
    a = relu(x @ p["actor_w1"] + p["actor_b1"])
    a = relu(a @ p["actor_w2"] + p["actor_b2"])
    mu = jnp.tanh(a @ p["actor_w3"] + p["actor_b3"])
    std = jnp.exp(p["log_std"]) * 0.2 * jnp.ones_like(mu)   # matches PyTorch spec
    return mu, std, value


# ----------------------------------------------------------------------------- main


if __name__ == "__main__":
    batch = 8
    num_inputs = 16
    num_outputs = 4
    hidden_size = 32

    key = jax.random.PRNGKey(0)
    k_x, k_p = jax.random.split(key)

    x = jax.random.normal(k_x, (batch, num_inputs), dtype=jnp.float32)
    params = init_actor_critic_params(k_p, num_inputs, num_outputs, hidden_size, std=0.0)
    packed = pack_params(params)

    mu, std, value = actor_critic_forward(x, packed)
    jax.block_until_ready((mu, std, value))

    mu_ref, std_ref, value_ref = _reference_forward(x, params)
    assert mu.shape == (batch, num_outputs)
    assert std.shape == (batch, num_outputs)
    assert value.shape == (batch, 1)
    assert jnp.allclose(mu, mu_ref, atol=1e-5, rtol=1e-5)
    assert jnp.allclose(std, std_ref, atol=1e-5, rtol=1e-5)
    assert jnp.allclose(value, value_ref, atol=1e-5, rtol=1e-5)

    # TODO(synk): torch.distributions.Normal has no Pallas equivalent; we return
    # its parameters (mu, std) instead of a distribution object.
    print("KERNEL_OK")
</pallas_src>

<mosaic_0001>
module attributes {stable_mosaic.version = 11 : i64} {
  func.func @_actor_critic_kernel(%arg0: i32, %arg1: memref<8x16xf32, #tpu.memory_space<vmem>>, %arg2: memref<16x64xf32, #tpu.memory_space<vmem>>, %arg3: memref<1x64xf32, #tpu.memory_space<vmem>>, %arg4: memref<64x64xf32, #tpu.memory_space<vmem>>, %arg5: memref<1x64xf32, #tpu.memory_space<vmem>>, %arg6: memref<64x8xf32, #tpu.memory_space<vmem>>, %arg7: memref<1x8xf32, #tpu.memory_space<vmem>>, %arg8: memref<8x8xf32, #tpu.memory_space<vmem>>) attributes {dimension_semantics = [#tpu.dimension_semantics<parallel>], iteration_bounds = array<i64: 1>, scalar_prefetch = 0 : i64, scratch_operands = 0 : i64, tpu.core_type = #tpu.core_type<tc>, window_params = [{transform_indices = @transform_0, window_bounds = array<i64: 8, 16>}, {pipeline_mode = #tpu.pipeline_mode<synchronous>, transform_indices = @transform_1, window_bounds = array<i64: 16, 64>}, {pipeline_mode = #tpu.pipeline_mode<synchronous>, transform_indices = @transform_2, window_bounds = array<i64: 1, 64>}, {pipeline_mode = #tpu.pipeline_mode<synchronous>, transform_indices = @transform_3, window_bounds = array<i64: 64, 64>}, {pipeline_mode = #tpu.pipeline_mode<synchronous>, transform_indices = @transform_4, window_bounds = array<i64: 1, 64>}, {pipeline_mode = #tpu.pipeline_mode<synchronous>, transform_indices = @transform_5, window_bounds = array<i64: 64, 8>}, {pipeline_mode = #tpu.pipeline_mode<synchronous>, transform_indices = @transform_6, window_bounds = array<i64: 1, 8>}, {transform_indices = @transform_7, window_bounds = array<i64: 8, 8>}]} {
    %c0 = arith.constant 0 : index
    %c0_0 = arith.constant 0 : index
    %0 = vector.load %arg1[%c0, %c0_0] : memref<8x16xf32, #tpu.memory_space<vmem>>, vector<8x16xf32>
    %c0_1 = arith.constant 0 : index
    %c0_2 = arith.constant 0 : index
    %1 = vector.load %arg2[%c0_1, %c0_2] : memref<16x64xf32, #tpu.memory_space<vmem>>, vector<16x64xf32>
    %cst = arith.constant dense<0.000000e+00> : vector<8x64xf32>
    %2 = tpu.matmul %0, %1, %cst {dimension_numbers = #tpu.dot_dimension_numbers<[1], [0], [0], [1], [0, 0, 1, 1], [], []>} : vector<8x16xf32>, vector<16x64xf32>, vector<8x64xf32> -> vector<8x64xf32>
    %c0_3 = arith.constant 0 : index
    %c0_4 = arith.constant 0 : index
    %3 = vector.load %arg3[%c0_3, %c0_4] : memref<1x64xf32, #tpu.memory_space<vmem>>, vector<1x64xf32>
    %4 = vector.broadcast %3 : vector<1x64xf32> to vector<8x64xf32>
    %5 = arith.addf %2, %4 : vector<8x64xf32>
    %cst_5 = arith.constant 0.000000e+00 : f32
    %6 = vector.broadcast %cst_5 : f32 to vector<8x64xf32>
    %7 = arith.maximumf %5, %6 : vector<8x64xf32>
    %c0_6 = arith.constant 0 : index
    %c0_7 = arith.constant 0 : index
    %8 = vector.load %arg4[%c0_6, %c0_7] : memref<64x64xf32, #tpu.memory_space<vmem>>, vector<64x64xf32>
    %cst_8 = arith.constant dense<0.000000e+00> : vector<8x64xf32>
    %9 = tpu.matmul %7, %8, %cst_8 {dimension_numbers = #tpu.dot_dimension_numbers<[1], [0], [0], [1], [0, 0, 1, 1], [], []>} : vector<8x64xf32>, vector<64x64xf32>, vector<8x64xf32> -> vector<8x64xf32>
    %c0_9 = arith.constant 0 : index
    %c0_10 = arith.constant 0 : index
    %10 = vector.load %arg5[%c0_9, %c0_10] : memref<1x64xf32, #tpu.memory_space<vmem>>, vector<1x64xf32>
    %11 = vector.broadcast %10 : vector<1x64xf32> to vector<8x64xf32>
    %12 = arith.addf %9, %11 : vector<8x64xf32>
    %cst_11 = arith.constant 0.000000e+00 : f32
    %13 = vector.broadcast %cst_11 : f32 to vector<8x64xf32>
    %14 = arith.maximumf %12, %13 : vector<8x64xf32>
    %c0_12 = arith.constant 0 : index
    %c0_13 = arith.constant 0 : index
    %15 = vector.load %arg6[%c0_12, %c0_13] : memref<64x8xf32, #tpu.memory_space<vmem>>, vector<64x8xf32>
    %cst_14 = arith.constant dense<0.000000e+00> : vector<8x8xf32>
    %16 = tpu.matmul %14, %15, %cst_14 {dimension_numbers = #tpu.dot_dimension_numbers<[1], [0], [0], [1], [0, 0, 1, 1], [], []>} : vector<8x64xf32>, vector<64x8xf32>, vector<8x8xf32> -> vector<8x8xf32>
    %c0_15 = arith.constant 0 : index
    %c0_16 = arith.constant 0 : index
    %17 = vector.load %arg7[%c0_15, %c0_16] : memref<1x8xf32, #tpu.memory_space<vmem>>, vector<1x8xf32>
    %18 = vector.broadcast %17 : vector<1x8xf32> to vector<8x8xf32>
    %19 = arith.addf %16, %18 : vector<8x8xf32>
    %c0_17 = arith.constant 0 : index
    %c0_18 = arith.constant 0 : index
    %20 = vector.load %arg8[%c0_17, %c0_18] : memref<8x8xf32, #tpu.memory_space<vmem>>, vector<8x8xf32>
    tpu.vector_store %arg8[%c0_17, %c0_18], %19 {strides = array<i32>} : memref<8x8xf32, #tpu.memory_space<vmem>>, vector<8x8xf32>,
    return
  }
  func.func @transform_0(%arg0: i32) -> (i32, i32) {
    %c0_i32 = arith.constant 0 : i32
    %c0_i32_0 = arith.constant 0 : i32
    return %arg0, %c0_i32 : i32, i32
  }
  func.func @transform_1(%arg0: i32) -> (i32, i32) {
    %c0_i32 = arith.constant 0 : i32
    %c0_i32_0 = arith.constant 0 : i32
    %c0_i32_1 = arith.constant 0 : i32
    return %c0_i32, %c0_i32_0 : i32, i32
  }
  func.func @transform_2(%arg0: i32) -> (i32, i32) {
    %c0_i32 = arith.constant 0 : i32
    %c0_i32_0 = arith.constant 0 : i32
    %c0_i32_1 = arith.constant 0 : i32
    return %c0_i32, %c0_i32_0 : i32, i32
  }
  func.func @transform_3(%arg0: i32) -> (i32, i32) {
    %c0_i32 = arith.constant 0 : i32
    %c0_i32_0 = arith.constant 0 : i32
    %c0_i32_1 = arith.constant 0 : i32
    return %c0_i32, %c0_i32_0 : i32, i32
  }
  func.func @transform_4(%arg0: i32) -> (i32, i32) {
    %c0_i32 = arith.constant 0 : i32
    %c0_i32_0 = arith.constant 0 : i32
    %c0_i32_1 = arith.constant 0 : i32
    return %c0_i32, %c0_i32_0 : i32, i32
  }
  func.func @transform_5(%arg0: i32) -> (i32, i32) {
    %c0_i32 = arith.constant 0 : i32
    %c0_i32_0 = arith.constant 0 : i32
    %c0_i32_1 = arith.constant 0 : i32
    return %c0_i32, %c0_i32_0 : i32, i32
  }
  func.func @transform_6(%arg0: i32) -> (i32, i32) {
    %c0_i32 = arith.constant 0 : i32
    %c0_i32_0 = arith.constant 0 : i32
    %c0_i32_1 = arith.constant 0 : i32
    return %c0_i32, %c0_i32_0 : i32, i32
  }
  func.func @transform_7(%arg0: i32) -> (i32, i32) {
    %c0_i32 = arith.constant 0 : i32
    %c0_i32_0 = arith.constant 0 : i32
    return %arg0, %c0_i32 : i32, i32
  }
}

</mosaic_0001>

<llo_original>
// kernel: actor_critic_forward.1
$region0: #{actor_critic_forward.1}
  #allocation0 [shape = 'u32[]', space=smem, size = 0x4, offset = 0x4, fixed_abs, tag = 'smem constant byte address 0x4 - core index']
  #allocation1 [shape = 'u32[72,128]{1,0:T(1,128)}', space=vmem, size = 0x9000, scoped, tag = 'internal scratch']
  %s0 = inlined_call_operand.vmem [shape: f32[8,16], index: 0, kind: input, shape index: {}]
  %s1 = inlined_call_operand.hbm [shape: f32[16,64], index: 1, kind: input, shape index: {}]
  %s2 = inlined_call_operand.vmem [shape: f32[1,64], index: 2, kind: input, shape index: {}]
  %s3 = inlined_call_operand.vmem [shape: f32[64,64], index: 3, kind: input, shape index: {}]
  %s4 = inlined_call_operand.vmem [shape: f32[1,64], index: 4, kind: input, shape index: {}]
  %s5 = inlined_call_operand.vmem [shape: f32[64,8], index: 5, kind: input, shape index: {}]
  %s6 = inlined_call_operand.vmem [shape: f32[1,8], index: 6, kind: input, shape index: {}]
  %s7 = inlined_call_operand.vmem [shape: f32[8,8], index: 7, kind: output, shape index: {}]
  %s8 = sld [smem:[#allocation0]]
  $region42: #{actor_critic_forward.1} parent=0
    _
  %s10 = ssub.s32 1, %s8
  %s11 = scalar_select 0, %s10, %s8
  $region1: #{actor_critic_forward.1} parent=0
    #allocation2 [shape = 'u8[8192]{0}', space=vmem, size = 0x2000, scoped, tag = 'input window, operand 1, single buffered']
    #allocation3 [shape = 's32[1]{0}', space=sflag, size = 0x4, scoped, tag = 'scoped memory for actor_critic_forward.1']
    %12 = vsyncpa [#allocation3], 0
    // Predicated region
    $region2: #{actor_critic_forward.1} parent=1 // pred_check
      _
    $region3: #{actor_critic_forward.1} parent=1 // pred_check_branch
      %14 = sbr.rel (0) target = $region5
    $region4: #{actor_critic_forward.1} parent=1 // pred_region
      _
    $region5: #{actor_critic_forward.1} parent=1 // pred_fallthru
      _
    // Predicated region
    $region6: #{actor_critic_forward.1} parent=1 // pred_check
      _
    $region7: #{actor_critic_forward.1} parent=1 // pred_check_branch
      %16 = sbr.rel (0) target = $region9
    $region8: #{actor_critic_forward.1} parent=1 // pred_region
      %18 = vsyncadd [#allocation3], 0
      %s19 = sshll.u32 %s1, 4
      %s20 = int_to_ptr.hbm [resolvable:$true] %s19
      %s21 = sshll.u32 [#allocation2], 4
      %s22 = int_to_ptr.vmem [resolvable:$true] %s21
      %27 = dma.hbm_to_vmem [thread:$0]  %s20, 256, %s22, [#allocation3], 128, 128, 8
    $region9: #{actor_critic_forward.1} parent=1 // pred_fallthru
      _
    // Predicated region
    $region10: #{actor_critic_forward.1} parent=1 // pred_check
      _
    $region11: #{actor_critic_forward.1} parent=1 // pred_check_branch
      %29 = sbr.rel (0) target = $region13
    $region12: #{actor_critic_forward.1} parent=1 // pred_region
      _
    $region13: #{actor_critic_forward.1} parent=1 // pred_fallthru
      _
    // Predicated region
    $region14: #{actor_critic_forward.1} parent=1 // pred_check
      _
    $region15: #{actor_critic_forward.1} parent=1 // pred_check_branch
      %31 = sbr.rel (0) target = $region17
    $region16: #{actor_critic_forward.1} parent=1 // pred_region
      _
    $region17: #{actor_critic_forward.1} parent=1 // pred_fallthru
      _
    // Predicated region
    $region18: #{actor_critic_forward.1} parent=1 // pred_check
      _
    $region19: #{actor_critic_forward.1} parent=1 // pred_check_branch
      %33 = sbr.rel (0) target = $region21
    $region20: #{actor_critic_forward.1} parent=1 // pred_region
      _
    $region21: #{actor_critic_forward.1} parent=1 // pred_fallthru
      _
    // Predicated region
    $region22: #{actor_critic_forward.1} parent=1 // pred_check
      _
    $region23: #{actor_critic_forward.1} parent=1 // pred_check_branch
      %35 = sbr.rel (0) target = $region25
    $region24: #{actor_critic_forward.1} parent=1 // pred_region
      _
    $region25: #{actor_critic_forward.1} parent=1 // pred_fallthru
      _
    // Predicated region
    $region26: #{actor_critic_forward.1} parent=1 // pred_check
      _
    $region27: #{actor_critic_forward.1} parent=1 // pred_check_branch
      %37 = sbr.rel (0) target = $region29
    $region28: #{actor_critic_forward.1} parent=1 // pred_region
      _
    $region29: #{actor_critic_forward.1} parent=1 // pred_fallthru
      _
    // Predicated region
    $region30: #{actor_critic_forward.1} parent=1 // pred_check
      _
    $region31: #{actor_critic_forward.1} parent=1 // pred_check_branch
      %39 = sbr.rel (0) target = $region33
    $region32: #{actor_critic_forward.1} parent=1 // pred_region
      %41 = dma.done [#allocation3], 256
    $region33: #{actor_critic_forward.1} parent=1 // pred_fallthru
      _
    %v42 = vld [vmem:[%s0] sm:$0xff]
    %v43 = vld [vmem:[#allocation2] sm:$0xff]
    %v44 = vld [vmem:[#allocation2 + $0x8] sm:$0xff]
    %v45 = vld [vmem:[%s2] sm:$0x1]
    %v47 = vperm.slane %v45, 0
    %vm49 = vcmask 130048
    %v51 = vsel %vm49, %v42, 0
    %53 = vmatpush.msra.mxu0 0.0
    %54 = vmatpush.msra.mxu0 0.0
    %55 = vmatpush.msra.mxu0 0.0
    %56 = vmatpush.msra.mxu0 0.0
    %57 = vmatpush.msra.mxu0 0.0
    %58 = vmatpush.msra.mxu0 0.0
    %59 = vmatpush.msra.mxu0 0.0
    %60 = vmatpush.msra.mxu0 0.0
    %61 = vmatpush.msra.mxu0 0.0
    %62 = vmatpush.msra.mxu0 0.0
    %63 = vmatpush.msra.mxu0 0.0
    %64 = vmatpush.msra.mxu0 0.0
    %65 = vmatpush.msra.mxu0 0.0
    %66 = vmatpush.msra.mxu0 0.0
    %67 = vmatpush.msra.mxu0 %v44
    %68 = vmatpush.msra.mxu0 %v43
    %69 = vmatmul.f32.gmra.mxu0 %v51
    %v70 = vpop.f32.mrf.mxu0
    %v71 = vadd.f32 %v47, %v70
    %72 = vdwg.mxu0
    %v73 = vmax.f32 %v71, 0.0
    %v74 = vld [vmem:[%s3] sm:$0xff]
    %v75 = vld [vmem:[%s3 + $0x8] sm:$0xff]
    %v76 = vld [vmem:[%s3 + $0x10] sm:$0xff]
    %v77 = vld [vmem:[%s3 + $0x18] sm:$0xff]
    %v78 = vld [vmem:[%s3 + $0x20] sm:$0xff]
    %v79 = vld [vmem:[%s3 + $0x28] sm:$0xff]
    %v80 = vld [vmem:[%s3 + $0x30] sm:$0xff]
    %v81 = vld [vmem:[%s3 + $0x38] sm:$0xff]
    %v82 = vld [vmem:[%s4] sm:$0x1]
    %v84 = vperm.slane %v82, 0
    %vm86 = vcmask 523264
    %v88 = vsel %vm86, %v73, 0
    %90 = vmatpush.msra.mxu0 0.0
    %91 = vmatpush.msra.mxu0 0.0
    %92 = vmatpush.msra.mxu0 0.0
    %93 = vmatpush.msra.mxu0 0.0
    %94 = vmatpush.msra.mxu0 0.0
    %95 = vmatpush.msra.mxu0 0.0
    %96 = vmatpush.msra.mxu0 0.0
    %97 = vmatpush.msra.mxu0 0.0
    %98 = vmatpush.msra.mxu0 %v81
    %99 = vmatpush.msra.mxu0 %v80
    %100 = vmatpush.msra.mxu0 %v79
    %101 = vmatpush.msra.mxu0 %v78
    %102 = vmatpush.msra.mxu0 %v77
    %103 = vmatpush.msra.mxu0 %v76
    %104 = vmatpush.msra.mxu0 %v75
    %105 = vmatpush.msra.mxu0 %v74
    %106 = vmatmul.f32.gmra.mxu0 %v88
    %v107 = vpop.f32.mrf.mxu0
    %v108 = vadd.f32 %v84, %v107
    %109 = vdwg.mxu0
    %v110 = vmax.f32 %v108, 0.0
    %v111 = vld [vmem:[%s5] sm:$0xff]
    %v112 = vld [vmem:[%s5 + $0x8] sm:$0xff]
    %v113 = vld [vmem:[%s5 + $0x10] sm:$0xff]
    %v114 = vld [vmem:[%s5 + $0x18] sm:$0xff]
    %v115 = vld [vmem:[%s5 + $0x20] sm:$0xff]
    %v116 = vld [vmem:[%s5 + $0x28] sm:$0xff]
    %v117 = vld [vmem:[%s5 + $0x30] sm:$0xff]
    %v118 = vld [vmem:[%s5 + $0x38] sm:$0xff]
    %v119 = vld [vmem:[%s6] sm:$0x1]
    %v121 = vperm.slane %v119, 0
    %v124 = vsel %vm86, %v110, 0
    %126 = vmatpush.msra.mxu0 0.0
    %127 = vmatpush.msra.mxu0 0.0
    %128 = vmatpush.msra.mxu0 0.0
    %129 = vmatpush.msra.mxu0 0.0
    %130 = vmatpush.msra.mxu0 0.0
    %131 = vmatpush.msra.mxu0 0.0
    %132 = vmatpush.msra.mxu0 0.0
    %133 = vmatpush.msra.mxu0 0.0
    %134 = vmatpush.msra.mxu0 %v118
    %135 = vmatpush.msra.mxu0 %v117
    %136 = vmatpush.msra.mxu0 %v116
    %137 = vmatpush.msra.mxu0 %v115
    %138 = vmatpush.msra.mxu0 %v114
    %139 = vmatpush.msra.mxu0 %v113
    %140 = vmatpush.msra.mxu0 %v112
    %141 = vmatpush.msra.mxu0 %v111
    %142 = vmatmul.f32.gmra.mxu0 %v124
    %v143 = vpop.f32.mrf.mxu0
    %v144 = vadd.f32 %v121, %v143
    %145 = vdwg.mxu0
    %vm146 = vcmask 64512
    %147 = vst.msk [vmem:[%s7] sm:$0xff] %vm146, %v144
    // Predicated region
    $region34: #{actor_critic_forward.1} parent=1 // pred_check
      _
    $region35: #{actor_critic_forward.1} parent=1 // pred_check_branch
      %149 = sbr.rel (0) target = $region37
    $region36: #{actor_critic_forward.1} parent=1 // pred_region
      _
    $region37: #{actor_critic_forward.1} parent=1 // pred_fallthru
      _
    // Predicated region
    $region38: #{actor_critic_forward.1} parent=1 // pred_check
      _
    $region39: #{actor_critic_forward.1} parent=1 // pred_check_branch
      %151 = sbr.rel (0) target = $region41
    $region40: #{actor_critic_forward.1} parent=1 // pred_region
      _
    $region41: #{actor_critic_forward.1} parent=1 // pred_fallthru
      _
    %152 = vsyncpa [#allocation3], 1

</llo_original>
